<compile_context>
chip_gen: v5e
topology: v5e:2x2
jax: 0.10.0
libtpu: 0.0.40
codegen_flags: <defaults>
</compile_context>

<pallas_src>
import math

import jax
import jax.numpy as jnp
from jax.experimental import pallas as pl
from jax.experimental.pallas import tpu as pltpu

# ----------------------------- configuration -----------------------------
NUM_EXPERTS = 7          # forced to 7 by the module's broadcasting (see note above)
NUM_SCENES = 7           # first dim of self.S
NUM_TASKS = 2
B = 8                    # batch
D = 32                   # input_dim
H1 = 32                  # expert_hidden_units[0]
H2 = 32                  # expert_hidden_units[1] (expert output dim)
EMB = 16                 # scene embedding dim
D16 = D + EMB            # concat(x, scene_emb) feature dim


# --------------------------- fused forward kernel ---------------------------
def fused_mmoe_kernel(scene_ref, xcat_ref, w1_ref, b1_ref, w2_ref, b2_ref, s_ref,
                      out_ref):
    xcat = xcat_ref[...]                               # [B, D16] = [x | scene_emb]
    x = xcat[:, :D]                                    # [B, D] (first D lanes are x)

    # ---- all 7 experts as two wide, lane-dense matmuls --------------------
    h = jnp.dot(x, w1_ref[...], preferred_element_type=jnp.float32) + b1_ref[...]
    h = jnp.maximum(h, 0.0)                            # [B, E*H1]
    eo = jnp.dot(h, w2_ref[...], preferred_element_type=jnp.float32) + b2_ref[...]
    eo = jnp.maximum(eo, 0.0)                          # [B, E*H2]; expert e -> lanes [e*H2,(e+1)*H2)

    # ---- gating: one matmul for all scenes ---------------------------------
    # logits[b, s*E + e] = sum_d xcat[b,d] * S[s,d,e]  (== pre-softmax G[b,e,s])
    logits = jnp.dot(xcat, s_ref[...], preferred_element_type=jnp.float32)   # [B, S*E]
    L = [logits[:, s * NUM_EXPERTS:(s + 1) * NUM_EXPERTS] for s in range(NUM_SCENES)]

    # log-softmax over the scene axis, computed directly (no log(softmax(...)))
    m = L[0]
    for s in range(1, NUM_SCENES):
        m = jnp.maximum(m, L[s])
    den = jnp.exp(L[0] - m)
    for s in range(1, NUM_SCENES):
        den = den + jnp.exp(L[s] - m)
    lse = m + jnp.log(den)                             # [B, E]

    # q[b,e] = mean_s log(7 * G[b,e,s]) = mean_s (L[s] - lse) + log(7)
    l_sum = L[0]
    for s in range(1, NUM_SCENES):
        l_sum = l_sum + L[s]
    q = (l_sum - NUM_SCENES * lse) * (1.0 / NUM_SCENES) + math.log(NUM_SCENES)

    # scene one-hot built in-kernel: ses[b,s] = (s == scene[b])
    scene_id = scene_ref[...]                          # [B, 1] int32
    lane = jax.lax.broadcasted_iota(jnp.int32, (B, NUM_SCENES), 1)
    ses = (lane == scene_id).astype(jnp.float32)       # [B, S]

    # p_score[b,e] = log G[b, e, scene[b]];  gate_raw[b,e] = G[b, e, scene[b]]
    lp = ses[:, 0:1] * L[0]
    for s in range(1, NUM_SCENES):
        lp = lp + ses[:, s:s + 1] * L[s]
    p_score = lp - lse                                 # [B, E]
    gate_raw = jnp.exp(p_score)

    # select = union(top6(p_score), top6(q)) over 7 experts
    #        = everything except the expert that is argmin of BOTH scores.
    p_min = jnp.min(p_score, axis=-1, keepdims=True)
    q_min = jnp.min(q, axis=-1, keepdims=True)
    excluded = jnp.logical_and(p_score <= p_min, q <= q_min)
    select = 1.0 - excluded.astype(jnp.float32)        # [B, E]

    # gate = softmax over experts, then mask
    gm = jnp.max(gate_raw, axis=-1, keepdims=True)
    ge = jnp.exp(gate_raw - gm)
    gate = ge / jnp.sum(ge, axis=-1, keepdims=True) * select   # [B, E]

    # out[b, h] = sum_e gate[b, e] * experts_output[b, e*H2 + h]
    acc = gate[:, 0:1] * eo[:, 0:H2]
    for e in range(1, NUM_EXPERTS):
        acc = acc + gate[:, e:e + 1] * eo[:, e * H2:(e + 1) * H2]
    out_ref[...] = acc.astype(out_ref.dtype)


def run_fused_mmoe(scene_i32, xcat, w1c, b1c, w2bd, b2c, s2):
    return pl.pallas_call(
        fused_mmoe_kernel,
        out_shape=jax.ShapeDtypeStruct((B, H2), jnp.float32),
        in_specs=[pl.BlockSpec(memory_space=pltpu.MemorySpace.VMEM) for _ in range(7)],
        out_specs=pl.BlockSpec(memory_space=pltpu.MemorySpace.VMEM),
    )(scene_i32, xcat, w1c, b1c, w2bd, b2c, s2)


# ------------------------ one-time weight-layout fusion ----------------------
def fuse_params(params):
    """PyTorch-layout params -> fused kernel layouts. Call ONCE (outside jit)."""
    W1, b1, W2, b2, S = params["W1"], params["b1"], params["W2"], params["b2"], params["S"]
    # layer-1: concat along output dim -> [D, E*H1]
    w1c = jnp.transpose(W1, (1, 0, 2)).reshape(D, NUM_EXPERTS * H1)
    b1c = b1.reshape(1, NUM_EXPERTS * H1)
    # layer-2: block-diagonal [E*H1, E*H2] -> single MXU pass
    eye_e = jnp.eye(NUM_EXPERTS, dtype=W2.dtype)
    w2bd = jnp.einsum("ehk,ef->ehfk", W2, eye_e).reshape(NUM_EXPERTS * H1, NUM_EXPERTS * H2)
    b2c = b2.reshape(1, NUM_EXPERTS * H2)
    # gate tensor: [S, D16, E] -> [D16, S*E]
    s2 = jnp.transpose(S, (1, 0, 2)).reshape(D16, NUM_SCENES * NUM_EXPERTS)
    return {"w1c": w1c, "b1c": b1c, "w2bd": w2bd, "b2c": b2c, "s2": s2,
            "emb": params["emb"]}


# ------------------------------- forward wrapper -----------------------------
@jax.jit
def mmoe_forward(x, scene, fp):
    scene = scene.astype(jnp.int32)
    scene_emb = fp["emb"][scene]                           # [B, 16]  (embedding gather)
    xcat = jnp.concatenate([x, scene_emb], axis=-1)        # [B, D+16]
    mix = run_fused_mmoe(scene[:, None], xcat,
                         fp["w1c"], fp["b1c"], fp["w2bd"], fp["b2c"], fp["s2"])
    # all tasks share the same gate (self.gate is dead code in forward)
    return [mix for _ in range(NUM_TASKS)]


# --------------------------- pure-JAX reference -------------------------------
def reference_forward(x, scene, params):
    eo = []
    for e in range(NUM_EXPERTS):
        h = jax.nn.relu(x @ params["W1"][e] + params["b1"][e])
        eo.append(jax.nn.relu(h @ params["W2"][e] + params["b2"][e]))
    experts_output = jnp.stack(eo, axis=1)                 # [B, E, H2]

    scene_emb = params["emb"][scene]
    xc = jnp.concatenate([x, scene_emb], axis=-1)
    G = jnp.einsum("bd,sde->bse", xc, params["S"])
    G = jnp.swapaxes(G, -2, -1)                            # [B, E, 7]
    G = jax.nn.softmax(G, axis=-1)
    p = jnp.log(G)
    q = jnp.sum(jnp.log(G * 7.0) / 7.0, axis=-1)           # [B, E]
    KG = jnp.eye(NUM_EXPERTS, dtype=jnp.float32)
    ses = KG[scene][:, None, :]                            # [B, 1, E]
    p_score = jnp.sum(ses * p, axis=-1)                    # [B, E]
    _, pi = jax.lax.top_k(p_score, 6)
    _, qi = jax.lax.top_k(q, 6)
    sel = jnp.sum(jnp.concatenate([KG[pi], KG[qi]], axis=1), axis=1)
    sel = (sel > 0).astype(jnp.float32)
    gate_raw = jnp.sum(G * ses, axis=-1)
    gate = jax.nn.softmax(gate_raw, axis=-1) * sel
    out = jnp.sum(gate[..., None] * experts_output, axis=1)
    return [out for _ in range(NUM_TASKS)]


# ------------------------------------ main -------------------------------------
if __name__ == "__main__":
    key = jax.random.PRNGKey(0)
    keys = jax.random.split(key, 8)

    params = {
        "W1": jax.random.normal(keys[0], (NUM_EXPERTS, D, H1), jnp.float32) * 0.1,
        "b1": jax.random.normal(keys[1], (NUM_EXPERTS, H1), jnp.float32) * 0.01,
        "W2": jax.random.normal(keys[2], (NUM_EXPERTS, H1, H2), jnp.float32) * 0.1,
        "b2": jax.random.normal(keys[3], (NUM_EXPERTS, H2), jnp.float32) * 0.01,
        # self.S : (7, input_dim + 16, num_experts), xavier_normal-ish scale
        "S": jax.random.normal(keys[4], (NUM_SCENES, D16, NUM_EXPERTS), jnp.float32) * 0.1,
        # nn.Embedding(10, 16)
        "emb": jax.random.normal(keys[5], (10, EMB), jnp.float32),
    }

    x = jax.random.normal(keys[6], (B, D), jnp.float32)
    # scene ids must be < num_experts (== 7) because forward indexes KG[scene]
    scene = jax.random.randint(keys[7], (B,), 0, NUM_EXPERTS, dtype=jnp.int32)

    fused = fuse_params(params)                           # one-time layout plumbing

    outs = mmoe_forward(x, scene, fused)
    outs = [jax.block_until_ready(o) for o in outs]

    refs = reference_forward(x, scene, params)
    for o, r in zip(outs, refs):
        assert o.shape == (B, H2)
        assert jnp.allclose(o, r, rtol=2e-2, atol=2e-2), float(jnp.max(jnp.abs(o - r)))

    # TODO(synk): aux_loss (training-side attribute side effect) and the unused
    # per-task gate MLPs (dead code in forward) are intentionally not implemented.
    print("KERNEL_OK")
</pallas_src>

<mosaic_0001>
module attributes {stable_mosaic.version = 11 : i64} {
  func.func @fused_mmoe_kernel(%arg0: memref<8x1xi32, #tpu.memory_space<vmem>>, %arg1: memref<8x48xf32, #tpu.memory_space<vmem>>, %arg2: memref<32x224xf32, #tpu.memory_space<vmem>>, %arg3: memref<1x224xf32, #tpu.memory_space<vmem>>, %arg4: memref<224x224xf32, #tpu.memory_space<vmem>>, %arg5: memref<1x224xf32, #tpu.memory_space<vmem>>, %arg6: memref<48x49xf32, #tpu.memory_space<vmem>>, %arg7: memref<8x32xf32, #tpu.memory_space<vmem>>) attributes {dimension_semantics = [], scalar_prefetch = 0 : i64, scratch_operands = 0 : i64, tpu.core_type = #tpu.core_type<tc>} {
    %c0 = arith.constant 0 : index
    %c0_0 = arith.constant 0 : index
    %0 = vector.load %arg1[%c0, %c0_0] : memref<8x48xf32, #tpu.memory_space<vmem>>, vector<8x48xf32>
    %1 = vector.extract_strided_slice %0 {offsets = [0, 0], sizes = [8, 32], strides = [1, 1]} : vector<8x48xf32> to vector<8x32xf32>
    %c0_1 = arith.constant 0 : index
    %c0_2 = arith.constant 0 : index
    %2 = vector.load %arg2[%c0_1, %c0_2] : memref<32x224xf32, #tpu.memory_space<vmem>>, vector<32x224xf32>
    %cst = arith.constant dense<0.000000e+00> : vector<8x224xf32>
    %3 = tpu.matmul %1, %2, %cst {dimension_numbers = #tpu.dot_dimension_numbers<[1], [0], [0], [1], [0, 0, 1, 1], [], []>} : vector<8x32xf32>, vector<32x224xf32>, vector<8x224xf32> -> vector<8x224xf32>
    %c0_3 = arith.constant 0 : index
    %c0_4 = arith.constant 0 : index
    %4 = vector.load %arg3[%c0_3, %c0_4] : memref<1x224xf32, #tpu.memory_space<vmem>>, vector<1x224xf32>
    %5 = vector.broadcast %4 : vector<1x224xf32> to vector<8x224xf32>
    %6 = arith.addf %3, %5 : vector<8x224xf32>
    %cst_5 = arith.constant 0.000000e+00 : f32
    %7 = vector.broadcast %cst_5 : f32 to vector<8x224xf32>
    %8 = arith.maximumf %6, %7 : vector<8x224xf32>
    %c0_6 = arith.constant 0 : index
    %c0_7 = arith.constant 0 : index
    %9 = vector.load %arg4[%c0_6, %c0_7] : memref<224x224xf32, #tpu.memory_space<vmem>>, vector<224x224xf32>
    %cst_8 = arith.constant dense<0.000000e+00> : vector<8x224xf32>
    %10 = tpu.matmul %8, %9, %cst_8 {dimension_numbers = #tpu.dot_dimension_numbers<[1], [0], [0], [1], [0, 0, 1, 1], [], []>} : vector<8x224xf32>, vector<224x224xf32>, vector<8x224xf32> -> vector<8x224xf32>
    %c0_9 = arith.constant 0 : index
    %c0_10 = arith.constant 0 : index
    %11 = vector.load %arg5[%c0_9, %c0_10] : memref<1x224xf32, #tpu.memory_space<vmem>>, vector<1x224xf32>
    %12 = vector.broadcast %11 : vector<1x224xf32> to vector<8x224xf32>
    %13 = arith.addf %10, %12 : vector<8x224xf32>
    %cst_11 = arith.constant 0.000000e+00 : f32
    %14 = vector.broadcast %cst_11 : f32 to vector<8x224xf32>
    %15 = arith.maximumf %13, %14 : vector<8x224xf32>
    %c0_12 = arith.constant 0 : index
    %c0_13 = arith.constant 0 : index
    %16 = vector.load %arg6[%c0_12, %c0_13] : memref<48x49xf32, #tpu.memory_space<vmem>>, vector<48x49xf32>
    %cst_14 = arith.constant dense<0.000000e+00> : vector<8x49xf32>
    %17 = tpu.matmul %0, %16, %cst_14 {dimension_numbers = #tpu.dot_dimension_numbers<[1], [0], [0], [1], [0, 0, 1, 1], [], []>} : vector<8x48xf32>, vector<48x49xf32>, vector<8x49xf32> -> vector<8x49xf32>
    %18 = vector.extract_strided_slice %17 {offsets = [0, 0], sizes = [8, 7], strides = [1, 1]} : vector<8x49xf32> to vector<8x7xf32>
    %19 = vector.extract_strided_slice %17 {offsets = [0, 7], sizes = [8, 7], strides = [1, 1]} : vector<8x49xf32> to vector<8x7xf32>
    %20 = vector.extract_strided_slice %17 {offsets = [0, 14], sizes = [8, 7], strides = [1, 1]} : vector<8x49xf32> to vector<8x7xf32>
    %21 = vector.extract_strided_slice %17 {offsets = [0, 21], sizes = [8, 7], strides = [1, 1]} : vector<8x49xf32> to vector<8x7xf32>
    %22 = vector.extract_strided_slice %17 {offsets = [0, 28], sizes = [8, 7], strides = [1, 1]} : vector<8x49xf32> to vector<8x7xf32>
    %23 = vector.extract_strided_slice %17 {offsets = [0, 35], sizes = [8, 7], strides = [1, 1]} : vector<8x49xf32> to vector<8x7xf32>
    %24 = vector.extract_strided_slice %17 {offsets = [0, 42], sizes = [8, 7], strides = [1, 1]} : vector<8x49xf32> to vector<8x7xf32>
    %25 = arith.maximumf %18, %19 : vector<8x7xf32>
    %26 = arith.maximumf %25, %20 : vector<8x7xf32>
    %27 = arith.maximumf %26, %21 : vector<8x7xf32>
    %28 = arith.maximumf %27, %22 : vector<8x7xf32>
    %29 = arith.maximumf %28, %23 : vector<8x7xf32>
    %30 = arith.maximumf %29, %24 : vector<8x7xf32>
    %31 = arith.subf %18, %30 : vector<8x7xf32>
    %32 = math.exp %31 : vector<8x7xf32>
    %33 = arith.subf %19, %30 : vector<8x7xf32>
    %34 = math.exp %33 : vector<8x7xf32>
    %35 = arith.addf %32, %34 : vector<8x7xf32>
    %36 = arith.subf %20, %30 : vector<8x7xf32>
    %37 = math.exp %36 : vector<8x7xf32>
    %38 = arith.addf %35, %37 : vector<8x7xf32>
    %39 = arith.subf %21, %30 : vector<8x7xf32>
    %40 = math.exp %39 : vector<8x7xf32>
    %41 = arith.addf %38, %40 : vector<8x7xf32>
    %42 = arith.subf %22, %30 : vector<8x7xf32>
    %43 = math.exp %42 : vector<8x7xf32>
    %44 = arith.addf %41, %43 : vector<8x7xf32>
    %45 = arith.subf %23, %30 : vector<8x7xf32>
    %46 = math.exp %45 : vector<8x7xf32>
    %47 = arith.addf %44, %46 : vector<8x7xf32>
    %48 = arith.subf %24, %30 : vector<8x7xf32>
    %49 = math.exp %48 : vector<8x7xf32>
    %50 = arith.addf %47, %49 : vector<8x7xf32>
    %51 = math.log %50 : vector<8x7xf32>
    %52 = arith.addf %30, %51 : vector<8x7xf32>
    %53 = arith.addf %18, %19 : vector<8x7xf32>
    %54 = arith.addf %53, %20 : vector<8x7xf32>
    %55 = arith.addf %54, %21 : vector<8x7xf32>
    %56 = arith.addf %55, %22 : vector<8x7xf32>
    %57 = arith.addf %56, %23 : vector<8x7xf32>
    %58 = arith.addf %57, %24 : vector<8x7xf32>
    %cst_15 = arith.constant 7.000000e+00 : f32
    %59 = vector.broadcast %cst_15 : f32 to vector<8x7xf32>
    %60 = arith.mulf %59, %52 : vector<8x7xf32>
    %61 = arith.subf %58, %60 : vector<8x7xf32>
    %cst_16 = arith.constant 0.142857149 : f32
    %62 = vector.broadcast %cst_16 : f32 to vector<8x7xf32>
    %63 = arith.mulf %61, %62 : vector<8x7xf32>
    %cst_17 = arith.constant 1.9459101 : f32
    %64 = vector.broadcast %cst_17 : f32 to vector<8x7xf32>
    %65 = arith.addf %63, %64 : vector<8x7xf32>
    %c0_18 = arith.constant 0 : index
    %c0_19 = arith.constant 0 : index
    %66 = vector.load %arg0[%c0_18, %c0_19] : memref<8x1xi32, #tpu.memory_space<vmem>>, vector<8x1xi32>
    %67 = tpu.iota {dimensions = array<i32: 1>} : vector<8x7xi32>
    %68 = vector.broadcast %66 : vector<8x1xi32> to vector<8x7xi32>
    %69 = arith.cmpi eq, %67, %68 : vector<8x7xi32>
    %70 = arith.extui %69 : vector<8x7xi1> to vector<8x7xi32>
    %71 = arith.sitofp %70 : vector<8x7xi32> to vector<8x7xf32>
    %72 = vector.extract_strided_slice %71 {offsets = [0, 0], sizes = [8, 1], strides = [1, 1]} : vector<8x7xf32> to vector<8x1xf32>
    %73 = vector.broadcast %72 : vector<8x1xf32> to vector<8x7xf32>
    %74 = arith.mulf %73, %18 : vector<8x7xf32>
    %75 = vector.extract_strided_slice %71 {offsets = [0, 1], sizes = [8, 1], strides = [1, 1]} : vector<8x7xf32> to vector<8x1xf32>
    %76 = vector.broadcast %75 : vector<8x1xf32> to vector<8x7xf32>
    %77 = arith.mulf %76, %19 : vector<8x7xf32>
    %78 = arith.addf %74, %77 : vector<8x7xf32>
    %79 = vector.extract_strided_slice %71 {offsets = [0, 2], sizes = [8, 1], strides = [1, 1]} : vector<8x7xf32> to vector<8x1xf32>
    %80 = vector.broadcast %79 : vector<8x1xf32> to vector<8x7xf32>
    %81 = arith.mulf %80, %20 : vector<8x7xf32>
    %82 = arith.addf %78, %81 : vector<8x7xf32>
    %83 = vector.extract_strided_slice %71 {offsets = [0, 3], sizes = [8, 1], strides = [1, 1]} : vector<8x7xf32> to vector<8x1xf32>
    %84 = vector.broadcast %83 : vector<8x1xf32> to vector<8x7xf32>
    %85 = arith.mulf %84, %21 : vector<8x7xf32>
    %86 = arith.addf %82, %85 : vector<8x7xf32>
    %87 = vector.extract_strided_slice %71 {offsets = [0, 4], sizes = [8, 1], strides = [1, 1]} : vector<8x7xf32> to vector<8x1xf32>
    %88 = vector.broadcast %87 : vector<8x1xf32> to vector<8x7xf32>
    %89 = arith.mulf %88, %22 : vector<8x7xf32>
    %90 = arith.addf %86, %89 : vector<8x7xf32>
    %91 = vector.extract_strided_slice %71 {offsets = [0, 5], sizes = [8, 1], strides = [1, 1]} : vector<8x7xf32> to vector<8x1xf32>
    %92 = vector.broadcast %91 : vector<8x1xf32> to vector<8x7xf32>
    %93 = arith.mulf %92, %23 : vector<8x7xf32>
    %94 = arith.addf %90, %93 : vector<8x7xf32>
    %95 = vector.extract_strided_slice %71 {offsets = [0, 6], sizes = [8, 1], strides = [1, 1]} : vector<8x7xf32> to vector<8x1xf32>
    %96 = vector.broadcast %95 : vector<8x1xf32> to vector<8x7xf32>
    %97 = arith.mulf %96, %24 : vector<8x7xf32>
    %98 = arith.addf %94, %97 : vector<8x7xf32>
    %99 = arith.subf %98, %52 : vector<8x7xf32>
    %100 = math.exp %99 : vector<8x7xf32>
    %cst_20 = arith.constant dense<0x7F800000> : vector<8xf32>
    %101 = vector.multi_reduction <minimumf>, %99, %cst_20 [1] : vector<8x7xf32> to vector<8xf32>
    %102 = vector.shape_cast %101 : vector<8xf32> to vector<8x1xf32>
    %cst_21 = arith.constant dense<0x7F800000> : vector<8xf32>
    %103 = vector.multi_reduction <minimumf>, %65, %cst_21 [1] : vector<8x7xf32> to vector<8xf32>
    %104 = vector.shape_cast %103 : vector<8xf32> to vector<8x1xf32>
    %105 = vector.broadcast %102 : vector<8x1xf32> to vector<8x7xf32>
    %106 = arith.cmpf ole, %99, %105 : vector<8x7xf32>
    %107 = vector.broadcast %104 : vector<8x1xf32> to vector<8x7xf32>
    %108 = arith.cmpf ole, %65, %107 : vector<8x7xf32>
    %109 = arith.andi %106, %108 : vector<8x7xi1>
    %110 = arith.extui %109 : vector<8x7xi1> to vector<8x7xi32>
    %111 = arith.sitofp %110 : vector<8x7xi32> to vector<8x7xf32>
    %cst_22 = arith.constant 1.000000e+00 : f32
    %112 = vector.broadcast %cst_22 : f32 to vector<8x7xf32>
    %113 = arith.subf %112, %111 : vector<8x7xf32>
    %cst_23 = arith.constant dense<0xFF800000> : vector<8xf32>
    %114 = vector.multi_reduction <maximumf>, %100, %cst_23 [1] : vector<8x7xf32> to vector<8xf32>
    %115 = vector.shape_cast %114 : vector<8xf32> to vector<8x1xf32>
    %116 = vector.broadcast %115 : vector<8x1xf32> to vector<8x7xf32>
    %117 = arith.subf %100, %116 : vector<8x7xf32>
    %118 = math.exp %117 : vector<8x7xf32>
    %cst_24 = arith.constant dense<0.000000e+00> : vector<8xf32>
    %119 = vector.multi_reduction <add>, %118, %cst_24 [1] : vector<8x7xf32> to vector<8xf32>
    %120 = vector.shape_cast %119 : vector<8xf32> to vector<8x1xf32>
    %121 = vector.broadcast %120 : vector<8x1xf32> to vector<8x7xf32>
    %122 = arith.divf %118, %121 : vector<8x7xf32>
    %123 = arith.mulf %122, %113 : vector<8x7xf32>
    %124 = vector.extract_strided_slice %123 {offsets = [0, 0], sizes = [8, 1], strides = [1, 1]} : vector<8x7xf32> to vector<8x1xf32>
    %125 = vector.extract_strided_slice %15 {offsets = [0, 0], sizes = [8, 32], strides = [1, 1]} : vector<8x224xf32> to vector<8x32xf32>
    %126 = vector.broadcast %124 : vector<8x1xf32> to vector<8x32xf32>
    %127 = arith.mulf %126, %125 : vector<8x32xf32>
    %128 = vector.extract_strided_slice %123 {offsets = [0, 1], sizes = [8, 1], strides = [1, 1]} : vector<8x7xf32> to vector<8x1xf32>
    %129 = vector.extract_strided_slice %15 {offsets = [0, 32], sizes = [8, 32], strides = [1, 1]} : vector<8x224xf32> to vector<8x32xf32>
    %130 = vector.broadcast %128 : vector<8x1xf32> to vector<8x32xf32>
    %131 = arith.mulf %130, %129 : vector<8x32xf32>
    %132 = arith.addf %127, %131 : vector<8x32xf32>
    %133 = vector.extract_strided_slice %123 {offsets = [0, 2], sizes = [8, 1], strides = [1, 1]} : vector<8x7xf32> to vector<8x1xf32>
    %134 = vector.extract_strided_slice %15 {offsets = [0, 64], sizes = [8, 32], strides = [1, 1]} : vector<8x224xf32> to vector<8x32xf32>
    %135 = vector.broadcast %133 : vector<8x1xf32> to vector<8x32xf32>
    %136 = arith.mulf %135, %134 : vector<8x32xf32>
    %137 = arith.addf %132, %136 : vector<8x32xf32>
    %138 = vector.extract_strided_slice %123 {offsets = [0, 3], sizes = [8, 1], strides = [1, 1]} : vector<8x7xf32> to vector<8x1xf32>
    %139 = vector.extract_strided_slice %15 {offsets = [0, 96], sizes = [8, 32], strides = [1, 1]} : vector<8x224xf32> to vector<8x32xf32>
    %140 = vector.broadcast %138 : vector<8x1xf32> to vector<8x32xf32>
    %141 = arith.mulf %140, %139 : vector<8x32xf32>
    %142 = arith.addf %137, %141 : vector<8x32xf32>
    %143 = vector.extract_strided_slice %123 {offsets = [0, 4], sizes = [8, 1], strides = [1, 1]} : vector<8x7xf32> to vector<8x1xf32>
    %144 = vector.extract_strided_slice %15 {offsets = [0, 128], sizes = [8, 32], strides = [1, 1]} : vector<8x224xf32> to vector<8x32xf32>
    %145 = vector.broadcast %143 : vector<8x1xf32> to vector<8x32xf32>
    %146 = arith.mulf %145, %144 : vector<8x32xf32>
    %147 = arith.addf %142, %146 : vector<8x32xf32>
    %148 = vector.extract_strided_slice %123 {offsets = [0, 5], sizes = [8, 1], strides = [1, 1]} : vector<8x7xf32> to vector<8x1xf32>
    %149 = vector.extract_strided_slice %15 {offsets = [0, 160], sizes = [8, 32], strides = [1, 1]} : vector<8x224xf32> to vector<8x32xf32>
    %150 = vector.broadcast %148 : vector<8x1xf32> to vector<8x32xf32>
    %151 = arith.mulf %150, %149 : vector<8x32xf32>
    %152 = arith.addf %147, %151 : vector<8x32xf32>
    %153 = vector.extract_strided_slice %123 {offsets = [0, 6], sizes = [8, 1], strides = [1, 1]} : vector<8x7xf32> to vector<8x1xf32>
    %154 = vector.extract_strided_slice %15 {offsets = [0, 192], sizes = [8, 32], strides = [1, 1]} : vector<8x224xf32> to vector<8x32xf32>
    %155 = vector.broadcast %153 : vector<8x1xf32> to vector<8x32xf32>
    %156 = arith.mulf %155, %154 : vector<8x32xf32>
    %157 = arith.addf %152, %156 : vector<8x32xf32>
    %c0_25 = arith.constant 0 : index
    %c0_26 = arith.constant 0 : index
    %158 = vector.load %arg7[%c0_25, %c0_26] : memref<8x32xf32, #tpu.memory_space<vmem>>, vector<8x32xf32>
    tpu.vector_store %arg7[%c0_25, %c0_26], %157 {strides = array<i32>} : memref<8x32xf32, #tpu.memory_space<vmem>>, vector<8x32xf32>,
    return
  }
}

</mosaic_0001>

<llo_original>
// kernel: mmoe_forward.1
$region0: #{mmoe_forward.1}
  #allocation0 [shape = 'u32[]', space=smem, size = 0x4, offset = 0x4, fixed_abs, tag = 'smem constant byte address 0x4 - core index']
  #allocation1 [shape = 'u32[72,128]{1,0:T(1,128)}', space=vmem, size = 0x9000, scoped, tag = 'internal scratch']
  %s0 = inlined_call_operand.vmem [shape: s32[8,1], index: 0, kind: input, shape index: {}]
  %s1 = inlined_call_operand.vmem [shape: f32[8,48], index: 1, kind: input, shape index: {}]
  %s2 = inlined_call_operand.vmem [shape: f32[32,224], index: 2, kind: input, shape index: {}]
  %s3 = inlined_call_operand.vmem [shape: f32[1,224], index: 3, kind: input, shape index: {}]
  %s4 = inlined_call_operand.hbm [shape: f32[224,224], index: 4, kind: input, shape index: {}]
  %s5 = inlined_call_operand.vmem [shape: f32[1,224], index: 5, kind: input, shape index: {}]
  %s6 = inlined_call_operand.hbm [shape: f32[48,49], index: 6, kind: input, shape index: {}]
  %s7 = inlined_call_operand.vmem [shape: f32[8,32], index: 7, kind: output, shape index: {}]
  %s8 = sld [smem:[#allocation0]]
  $region46: #{mmoe_forward.1} parent=0
    _
  %s10 = ssub.s32 1, %s8
  %s11 = scalar_select 0, %s10, %s8
  $region1: #{mmoe_forward.1} parent=0
    #allocation2 [shape = 'u8[229376]{0}', space=vmem, size = 0x38000, scoped, tag = 'input window, operand 4, single buffered']
    #allocation3 [shape = 's32[1]{0}', space=sflag, size = 0x4, scoped, tag = 'scoped memory for mmoe_forward.1']
    #allocation4 [shape = 'u8[24576]{0}', space=vmem, size = 0x6000, scoped, tag = 'input window, operand 6, single buffered']
    #allocation5 [shape = 's32[1]{0}', space=sflag, size = 0x4, scoped, tag = 'scoped memory for mmoe_forward.1']
    %12 = vsyncpa [#allocation3], 0
    %13 = vsyncpa [#allocation5], 0
    // Predicated region
    $region2: #{mmoe_forward.1} parent=1 // pred_check
      _
    $region3: #{mmoe_forward.1} parent=1 // pred_check_branch
      %15 = sbr.rel (0) target = $region5
    $region4: #{mmoe_forward.1} parent=1 // pred_region
      _
    $region5: #{mmoe_forward.1} parent=1 // pred_fallthru
      _
    // Predicated region
    $region6: #{mmoe_forward.1} parent=1 // pred_check
      _
    $region7: #{mmoe_forward.1} parent=1 // pred_check_branch
      %17 = sbr.rel (0) target = $region9
    $region8: #{mmoe_forward.1} parent=1 // pred_region
      _
    $region9: #{mmoe_forward.1} parent=1 // pred_fallthru
      _
    // Predicated region
    $region10: #{mmoe_forward.1} parent=1 // pred_check
      _
    $region11: #{mmoe_forward.1} parent=1 // pred_check_branch
      %19 = sbr.rel (0) target = $region13
    $region12: #{mmoe_forward.1} parent=1 // pred_region
      _
    $region13: #{mmoe_forward.1} parent=1 // pred_fallthru
      _
    // Predicated region
    $region14: #{mmoe_forward.1} parent=1 // pred_check
      _
    $region15: #{mmoe_forward.1} parent=1 // pred_check_branch
      %21 = sbr.rel (0) target = $region17
    $region16: #{mmoe_forward.1} parent=1 // pred_region
      _
    $region17: #{mmoe_forward.1} parent=1 // pred_fallthru
      _
    // Predicated region
    $region18: #{mmoe_forward.1} parent=1 // pred_check
      _
    $region19: #{mmoe_forward.1} parent=1 // pred_check_branch
      %23 = sbr.rel (0) target = $region21
    $region20: #{mmoe_forward.1} parent=1 // pred_region
      %25 = vsyncadd [#allocation3], 0
      %s26 = sshll.u32 %s4, 4
      %s27 = int_to_ptr.hbm [resolvable:$true] %s26
      %s28 = sshll.u32 [#allocation2], 4
      %s29 = int_to_ptr.vmem [resolvable:$true] %s28
      %34 = dma.hbm_to_vmem [thread:$0]  %s27, 7168, %s29, [#allocation3], 256, 256, 16
    $region21: #{mmoe_forward.1} parent=1 // pred_fallthru
      _
    // Predicated region
    $region22: #{mmoe_forward.1} parent=1 // pred_check
      _
    $region23: #{mmoe_forward.1} parent=1 // pred_check_branch
      %36 = sbr.rel (0) target = $region25
    $region24: #{mmoe_forward.1} parent=1 // pred_region
      _
    $region25: #{mmoe_forward.1} parent=1 // pred_fallthru
      _
    // Predicated region
    $region26: #{mmoe_forward.1} parent=1 // pred_check
      _
    $region27: #{mmoe_forward.1} parent=1 // pred_check_branch
      %38 = sbr.rel (0) target = $region29
    $region28: #{mmoe_forward.1} parent=1 // pred_region
      %40 = vsyncadd [#allocation5], 0
      %s41 = sshll.u32 %s6, 4
      %s42 = int_to_ptr.hbm [resolvable:$true] %s41
      %s43 = sshll.u32 [#allocation4], 4
      %s44 = int_to_ptr.vmem [resolvable:$true] %s43
      %49 = dma.hbm_to_vmem [thread:$0]  %s42, 768, %s44, [#allocation5], 128, 128, 8
    $region29: #{mmoe_forward.1} parent=1 // pred_fallthru
      _
    // Predicated region
    $region30: #{mmoe_forward.1} parent=1 // pred_check
      _
    $region31: #{mmoe_forward.1} parent=1 // pred_check_branch
      %51 = sbr.rel (0) target = $region33
    $region32: #{mmoe_forward.1} parent=1 // pred_region
      %53 = dma.done [#allocation3], 7168
    $region33: #{mmoe_forward.1} parent=1 // pred_fallthru
      _
    // Predicated region
    $region34: #{mmoe_forward.1} parent=1 // pred_check
      _
    $region35: #{mmoe_forward.1} parent=1 // pred_check_branch
      %55 = sbr.rel (0) target = $region37
    $region36: #{mmoe_forward.1} parent=1 // pred_region
      %57 = dma.done [#allocation5], 768
    $region37: #{mmoe_forward.1} parent=1 // pred_fallthru
      _
    %v58 = vld [vmem:[%s1] sm:$0xff]
    %v59 = vld [vmem:[%s2] sm:$0xff]
    %v60 = vld [vmem:[%s2 + $0x8] sm:$0xff]
    %v61 = vld [vmem:[%s2 + $0x10] sm:$0xff]
    %v62 = vld [vmem:[%s2 + $0x18] sm:$0xff]
    %v63 = vld [vmem:[%s2 + $0x20] sm:$0xff]
    %v64 = vld [vmem:[%s2 + $0x28] sm:$0xff]
    %v65 = vld [vmem:[%s2 + $0x30] sm:$0xff]
    %v66 = vld [vmem:[%s2 + $0x38] sm:$0xff]
    %v67 = vld [vmem:[%s3] sm:$0x3]
    %v69 = vperm.slane %v67, 0
    %v70 = vperm.slane %v67, 1
    %vm73 = vcmask 261120
    %v75 = vsel %vm73, %v58, 0
    %77 = vmatpush.msra.mxu0 0.0
    %78 = vmatpush.msra.mxu0 0.0
    %79 = vmatpush.msra.mxu0 0.0
    %80 = vmatpush.msra.mxu0 0.0
    %81 = vmatpush.msra.mxu0 0.0
    %82 = vmatpush.msra.mxu0 0.0
    %83 = vmatpush.msra.mxu0 0.0
    %84 = vmatpush.msra.mxu0 0.0
    %85 = vmatpush.msra.mxu0 0.0
    %86 = vmatpush.msra.mxu0 0.0
    %87 = vmatpush.msra.mxu0 0.0
    %88 = vmatpush.msra.mxu0 0.0
    %89 = vmatpush.msra.mxu0 %v65
    %90 = vmatpush.msra.mxu0 %v63
    %91 = vmatpush.msra.mxu0 %v61
    %92 = vmatpush.msra.mxu0 %v59
    %93 = vmatmul.f32.gmra.mxu0 %v75
    %v94 = vpop.f32.mrf.mxu0
    %v95 = vadd.f32 %v69, %v94
    %96 = vdwg.mxu0
    %97 = vmatpush.msra.mxu0 0.0
    %98 = vmatpush.msra.mxu0 0.0
    %99 = vmatpush.msra.mxu0 0.0
    %100 = vmatpush.msra.mxu0 0.0
    %101 = vmatpush.msra.mxu0 0.0
    %102 = vmatpush.msra.mxu0 0.0
    %103 = vmatpush.msra.mxu0 0.0
    %104 = vmatpush.msra.mxu0 0.0
    %105 = vmatpush.msra.mxu0 0.0
    %106 = vmatpush.msra.mxu0 0.0
    %107 = vmatpush.msra.mxu0 0.0
    %108 = vmatpush.msra.mxu0 0.0
    %109 = vmatpush.msra.mxu0 %v66
    %110 = vmatpush.msra.mxu0 %v64
    %111 = vmatpush.msra.mxu0 %v62
    %112 = vmatpush.msra.mxu0 %v60
    %113 = vmatmul.f32.gmra.mxu0 %v75
    %v114 = vpop.f32.mrf.mxu0
    %v115 = vadd.f32 %v70, %v114
    %116 = vdwg.mxu0
    %v117 = vmax.f32 %v95, 0.0
    %v118 = vmax.f32 %v115, 0.0
    %v119 = vld [vmem:[#allocation2] sm:$0xff]
    %v120 = vld [vmem:[#allocation2 + $0x8] sm:$0xff]
    %v121 = vld [vmem:[#allocation2 + $0x10] sm:$0xff]
    %v122 = vld [vmem:[#allocation2 + $0x18] sm:$0xff]
    %v123 = vld [vmem:[#allocation2 + $0x20] sm:$0xff]
    %v124 = vld [vmem:[#allocation2 + $0x28] sm:$0xff]
    %v125 = vld [vmem:[#allocation2 + $0x30] sm:$0xff]
    %v126 = vld [vmem:[#allocation2 + $0x38] sm:$0xff]
    %v127 = vld [vmem:[#allocation2 + $0x40] sm:$0xff]
    %v128 = vld [vmem:[#allocation2 + $0x48] sm:$0xff]
    %v129 = vld [vmem:[#allocation2 + $0x50] sm:$0xff]
    %v130 = vld [vmem:[#allocation2 + $0x58] sm:$0xff]
    %v131 = vld [vmem:[#allocation2 + $0x60] sm:$0xff]
    %v132 = vld [vmem:[#allocation2 + $0x68] sm:$0xff]
    %v133 = vld [vmem:[#allocation2 + $0x70] sm:$0xff]
    %v134 = vld [vmem:[#allocation2 + $0x78] sm:$0xff]
    %v135 = vld [vmem:[#allocation2 + $0x80] sm:$0xff]
    %v136 = vld [vmem:[#allocation2 + $0x88] sm:$0xff]
    %v137 = vld [vmem:[#allocation2 + $0x90] sm:$0xff]
    %v138 = vld [vmem:[#allocation2 + $0x98] sm:$0xff]
    %v139 = vld [vmem:[#allocation2 + $0xa0] sm:$0xff]
    %v140 = vld [vmem:[#allocation2 + $0xa8] sm:$0xff]
    %v141 = vld [vmem:[#allocation2 + $0xb0] sm:$0xff]
    %v142 = vld [vmem:[#allocation2 + $0xb8] sm:$0xff]
    %v143 = vld [vmem:[#allocation2 + $0xc0] sm:$0xff]
    %v144 = vld [vmem:[#allocation2 + $0xc8] sm:$0xff]
    %v145 = vld [vmem:[#allocation2 + $0xd0] sm:$0xff]
    %v146 = vld [vmem:[#allocation2 + $0xd8] sm:$0xff]
    %v147 = vld [vmem:[#allocation2 + $0xe0] sm:$0xff]
    %v148 = vld [vmem:[#allocation2 + $0xe8] sm:$0xff]
    %v149 = vld [vmem:[#allocation2 + $0xf0] sm:$0xff]
    %v150 = vld [vmem:[#allocation2 + $0xf8] sm:$0xff]
    %v151 = vld [vmem:[#allocation2 + $0x100] sm:$0xff]
    %v152 = vld [vmem:[#allocation2 + $0x108] sm:$0xff]
    %v153 = vld [vmem:[#allocation2 + $0x110] sm:$0xff]
    %v154 = vld [vmem:[#allocation2 + $0x118] sm:$0xff]
    %v155 = vld [vmem:[#allocation2 + $0x120] sm:$0xff]
    %v156 = vld [vmem:[#allocation2 + $0x128] sm:$0xff]
    %v157 = vld [vmem:[#allocation2 + $0x130] sm:$0xff]
    %v158 = vld [vmem:[#allocation2 + $0x138] sm:$0xff]
    %v159 = vld [vmem:[#allocation2 + $0x140] sm:$0xff]
    %v160 = vld [vmem:[#allocation2 + $0x148] sm:$0xff]
    %v161 = vld [vmem:[#allocation2 + $0x150] sm:$0xff]
    %v162 = vld [vmem:[#allocation2 + $0x158] sm:$0xff]
    %v163 = vld [vmem:[#allocation2 + $0x160] sm:$0xff]
    %v164 = vld [vmem:[#allocation2 + $0x168] sm:$0xff]
    %v165 = vld [vmem:[#allocation2 + $0x170] sm:$0xff]
    %v166 = vld [vmem:[#allocation2 + $0x178] sm:$0xff]
    %v167 = vld [vmem:[#allocation2 + $0x180] sm:$0xff]
    %v168 = vld [vmem:[#allocation2 + $0x188] sm:$0xff]
    %v169 = vld [vmem:[#allocation2 + $0x190] sm:$0xff]
    %v170 = vld [vmem:[#allocation2 + $0x198] sm:$0xff]
    %v171 = vld [vmem:[#allocation2 + $0x1a0] sm:$0xff]
    %v172 = vld [vmem:[#allocation2 + $0x1a8] sm:$0xff]
    %v173 = vld [vmem:[#allocation2 + $0x1b0] sm:$0xff]
    %v174 = vld [vmem:[#allocation2 + $0x1b8] sm:$0xff]
    %v175 = vld [vmem:[%s5] sm:$0x3]
    %v177 = vperm.slane %v175, 0
    %v178 = vperm.slane %v175, 1
    %vm181 = vcmask 785408
    %v183 = vsel %vm181, %v118, 0
    %185 = vmatpush.msra.mxu0 %v149
    %186 = vmatpush.msra.mxu0 %v147
    %187 = vmatpush.msra.mxu0 %v145
    %188 = vmatpush.msra.mxu0 %v143
    %189 = vmatpush.msra.mxu0 %v141
    %190 = vmatpush.msra.mxu0 %v139
    %191 = vmatpush.msra.mxu0 %v137
    %192 = vmatpush.msra.mxu0 %v135
    %193 = vmatpush.msra.mxu0 %v133
    %194 = vmatpush.msra.mxu0 %v131
    %195 = vmatpush.msra.mxu0 %v129
    %196 = vmatpush.msra.mxu0 %v127
    %197 = vmatpush.msra.mxu0 %v125
    %198 = vmatpush.msra.mxu0 %v123
    %199 = vmatpush.msra.mxu0 %v121
    %200 = vmatpush.msra.mxu0 %v119
    %201 = vmatmul.f32.gmra.mxu0 %v117
    %v202 = vpop.f32.mrf.mxu0
    %v203 = vadd.f32 %v177, %v202
    %204 = vdwg.mxu0
    %205 = vmatpush.msra.mxu0 0.0
    %206 = vmatpush.msra.mxu0 0.0
    %207 = vmatpush.msra.mxu0 0.0
    %208 = vmatpush.msra.mxu0 0.0
    %209 = vmatpush.msra.mxu0 %v173
    %210 = vmatpush.msra.mxu0 %v171
    %211 = vmatpush.msra.mxu0 %v169
    %212 = vmatpush.msra.mxu0 %v167
    %213 = vmatpush.msra.mxu0 %v165
    %214 = vmatpush.msra.mxu0 %v163
    %215 = vmatpush.msra.mxu0 %v161
    %216 = vmatpush.msra.mxu0 %v159
    %217 = vmatpush.msra.mxu0 %v157
    %218 = vmatpush.msra.mxu0 %v155
    %219 = vmatpush.msra.mxu0 %v153
    %220 = vmatpush.msra.mxu0 %v151
    %221 = vmatmul.f32.gmra.mxu0 %v183
    %v222 = vpop.f32.mrf.mxu0
    %v223 = vadd.f32 %v203, %v222
    %224 = vdwg.mxu0
    %225 = vmatpush.msra.mxu0 %v150
    %226 = vmatpush.msra.mxu0 %v148
    %227 = vmatpush.msra.mxu0 %v146
    %228 = vmatpush.msra.mxu0 %v144
    %229 = vmatpush.msra.mxu0 %v142
    %230 = vmatpush.msra.mxu0 %v140
    %231 = vmatpush.msra.mxu0 %v138
    %232 = vmatpush.msra.mxu0 %v136
    %233 = vmatpush.msra.mxu0 %v134
    %234 = vmatpush.msra.mxu0 %v132
    %235 = vmatpush.msra.mxu0 %v130
    %236 = vmatpush.msra.mxu0 %v128
    %237 = vmatpush.msra.mxu0 %v126
    %238 = vmatpush.msra.mxu0 %v124
    %239 = vmatpush.msra.mxu0 %v122
    %240 = vmatpush.msra.mxu0 %v120
    %241 = vmatmul.f32.gmra.mxu0 %v117
    %v242 = vpop.f32.mrf.mxu0
    %v243 = vadd.f32 %v178, %v242
    %244 = vdwg.mxu0
    %245 = vmatpush.msra.mxu0 0.0
    %246 = vmatpush.msra.mxu0 0.0
    %247 = vmatpush.msra.mxu0 0.0
    %248 = vmatpush.msra.mxu0 0.0
    %249 = vmatpush.msra.mxu0 %v174
    %250 = vmatpush.msra.mxu0 %v172
    %251 = vmatpush.msra.mxu0 %v170
    %252 = vmatpush.msra.mxu0 %v168
    %253 = vmatpush.msra.mxu0 %v166
    %254 = vmatpush.msra.mxu0 %v164
    %255 = vmatpush.msra.mxu0 %v162
    %256 = vmatpush.msra.mxu0 %v160
    %257 = vmatpush.msra.mxu0 %v158
    %258 = vmatpush.msra.mxu0 %v156
    %259 = vmatpush.msra.mxu0 %v154
    %260 = vmatpush.msra.mxu0 %v152
    %261 = vmatmul.f32.gmra.mxu0 %v183
    %v262 = vpop.f32.mrf.mxu0
    %v263 = vadd.f32 %v243, %v262
    %264 = vdwg.mxu0
    %v265 = vmax.f32 %v223, 0.0
    %v266 = vmax.f32 %v263, 0.0
    %v267 = vld [vmem:[#allocation4] sm:$0xff]
    %v268 = vld [vmem:[#allocation4 + $0x8] sm:$0xff]
    %v269 = vld [vmem:[#allocation4 + $0x10] sm:$0xff]
    %v270 = vld [vmem:[#allocation4 + $0x18] sm:$0xff]
    %v271 = vld [vmem:[#allocation4 + $0x20] sm:$0xff]
    %v272 = vld [vmem:[#allocation4 + $0x28] sm:$0xff]
    %vm273 = vcmask 392192
    %v274 = vsel %vm273, %v58, 0
    %276 = vmatpush.msra.mxu0 0.0
    %277 = vmatpush.msra.mxu0 0.0
    %278 = vmatpush.msra.mxu0 0.0
    %279 = vmatpush.msra.mxu0 0.0
    %280 = vmatpush.msra.mxu0 0.0
    %281 = vmatpush.msra.mxu0 0.0
    %282 = vmatpush.msra.mxu0 0.0
    %283 = vmatpush.msra.mxu0 0.0
    %284 = vmatpush.msra.mxu0 0.0
    %285 = vmatpush.msra.mxu0 0.0
    %286 = vmatpush.msra.mxu0 %v272
    %287 = vmatpush.msra.mxu0 %v271
    %288 = vmatpush.msra.mxu0 %v270
    %289 = vmatpush.msra.mxu0 %v269
    %290 = vmatpush.msra.mxu0 %v268
    %291 = vmatpush.msra.mxu0 %v267
    %292 = vmatmul.f32.gmra.mxu0 %v274
    %v293 = vpop.f32.mrf.mxu0
    %v294 = vadd.f32 0.0, %v293
    %295 = vdwg.mxu0
    %297 = vrot.lane.b32.xlu0 %v294, 121
    %v298 = vpop.permute.xlu0 %297
    %v300 = vmax.f32 %v294, %v298
    %301 = vrot.lane.b32.xlu0 %v294, 114
    %v302 = vpop.permute.xlu0 %301
    %v304 = vmax.f32 %v300, %v302
    %305 = vrot.lane.b32.xlu0 %v294, 107
    %v306 = vpop.permute.xlu0 %305
    %v308 = vmax.f32 %v304, %v306
    %309 = vrot.lane.b32.xlu0 %v294, 100
    %v310 = vpop.permute.xlu0 %309
    %v312 = vmax.f32 %v308, %v310
    %313 = vrot.lane.b32.xlu0 %v294, 93
    %v314 = vpop.permute.xlu0 %313
    %v316 = vmax.f32 %v312, %v314
    %317 = vrot.lane.b32.xlu0 %v294, 86
    %v318 = vpop.permute.xlu0 %317
    %v320 = vmax.f32 %v316, %v318
    %v321 = vsub.f32 %v294, %v320
    %v322 = vmul.f32 %v321, 1.442695
    %v323 = vpow.pop %v322
    %325 = vrot.lane.b32.xlu0 %v320, 7
    %v326 = vpop.permute.xlu0 %325
    %v328 = vsub.f32 %v294, %v326
    %v329 = vmul.f32 %v328, 1.442695
    %v330 = vpow.pop %v329
    %332 = vrot.lane.b32.xlu0 %v330, 121
    %v333 = vpop.permute.xlu0 %332
    %v335 = vadd.f32 %v323, %v333
    %336 = vrot.lane.b32.xlu0 %v320, 14
    %v337 = vpop.permute.xlu0 %336
    %v339 = vsub.f32 %v294, %v337
    %v340 = vmul.f32 %v339, 1.442695
    %v341 = vpow.pop %v340
    %343 = vrot.lane.b32.xlu0 %v341, 114
    %v344 = vpop.permute.xlu0 %343
    %v346 = vadd.f32 %v335, %v344
    %347 = vrot.lane.b32.xlu0 %v320, 21
    %v348 = vpop.permute.xlu0 %347
    %v350 = vsub.f32 %v294, %v348
    %v351 = vmul.f32 %v350, 1.442695
    %v352 = vpow.pop %v351
    %354 = vrot.lane.b32.xlu0 %v352, 107
    %v355 = vpop.permute.xlu0 %354
    %v357 = vadd.f32 %v346, %v355
    %358 = vrot.lane.b32.xlu0 %v320, 28
    %v359 = vpop.permute.xlu0 %358
    %v361 = vsub.f32 %v294, %v359
    %v362 = vmul.f32 %v361, 1.442695
    %v363 = vpow.pop %v362
    %365 = vrot.lane.b32.xlu0 %v363, 100
    %v366 = vpop.permute.xlu0 %365
    %v368 = vadd.f32 %v357, %v366
    %369 = vrot.lane.b32.xlu0 %v320, 35
    %v370 = vpop.permute.xlu0 %369
    %v372 = vsub.f32 %v294, %v370
    %v373 = vmul.f32 %v372, 1.442695
    %v374 = vpow.pop %v373
    %376 = vrot.lane.b32.xlu0 %v374, 93
    %v377 = vpop.permute.xlu0 %376
    %v379 = vadd.f32 %v368, %v377
    %380 = vrot.lane.b32.xlu0 %v320, 42
    %v381 = vpop.permute.xlu0 %380
    %v383 = vsub.f32 %v294, %v381
    %v384 = vmul.f32 %v383, 1.442695
    %v385 = vpow.pop %v384
    %387 = vrot.lane.b32.xlu0 %v385, 86
    %v388 = vpop.permute.xlu0 %387
    %v390 = vadd.f32 %v379, %v388
    %v391 = vlog2.pop %v390
    %v392 = vmul.f32 %v391, 0.6931472
    %v393 = vadd.f32 %v320, %v392
    %v394 = vadd.f32 %v294, %v298
    %v395 = vadd.f32 %v394, %v302
    %v396 = vadd.f32 %v395, %v306
    %v397 = vadd.f32 %v396, %v310
    %v398 = vadd.f32 %v397, %v314
    %v399 = vadd.f32 %v398, %v318
    %v400 = vmul.f32 %v393, 7.0
    %v401 = vsub.f32 %v399, %v400
    %v402 = vmul.f32 %v401, 0.14285715
    %v403 = vadd.f32 %v402, 1.9459101
    %v404 = vld [vmem:[%s0] sm:$0xff]
    %v405 = vlaneseq
    %v406 = vand.u32 %v405, 127
    %407 = vset.pattern.permute.xlu0 0
    %408 = vperm.xlu0 %407, %v404
    %v409 = vpop.permute.xlu0 %408
    %vm410 = vcmp.eq.s32.totalorder %v406, %v409
    %v411 = vsel %vm410, 1, 0
    %v412 = vcvt.s32.f32 %v411
    %414 = vset.pattern.permute.xlu0 0
    %415 = vperm.xlu0 %414, %v412
    %v416 = vpop.permute.xlu0 %415
    %v418 = vmul.f32 %v416, %v294
    %419 = vset.pattern.permute.xlu0 1
    %420 = vperm.xlu0 %419, %v412
    %v421 = vpop.permute.xlu0 %420
    %v423 = vmul.f32 %v421, %v294
    %425 = vrot.lane.b32.xlu0 %v423, 121
    %v426 = vpop.permute.xlu0 %425
    %v428 = vadd.f32 %v418, %v426
    %429 = vset.pattern.permute.xlu0 2
    %430 = vperm.xlu0 %429, %v412
    %v431 = vpop.permute.xlu0 %430
    %v433 = vmul.f32 %v431, %v294
    %435 = vrot.lane.b32.xlu0 %v433, 114
    %v436 = vpop.permute.xlu0 %435
    %v438 = vadd.f32 %v428, %v436
    %439 = vset.pattern.permute.xlu0 3
    %440 = vperm.xlu0 %439, %v412
    %v441 = vpop.permute.xlu0 %440
    %v443 = vmul.f32 %v441, %v294
    %445 = vrot.lane.b32.xlu0 %v443, 107
    %v446 = vpop.permute.xlu0 %445
    %v448 = vadd.f32 %v438, %v446
    %449 = vset.pattern.permute.xlu0 4
    %450 = vperm.xlu0 %449, %v412
    %v451 = vpop.permute.xlu0 %450
    %v453 = vmul.f32 %v451, %v294
    %455 = vrot.lane.b32.xlu0 %v453, 100
    %v456 = vpop.permute.xlu0 %455
    %v458 = vadd.f32 %v448, %v456
    %459 = vset.pattern.permute.xlu0 5
    %460 = vperm.xlu0 %459, %v412
    %v461 = vpop.permute.xlu0 %460
    %v463 = vmul.f32 %v461, %v294
    %465 = vrot.lane.b32.xlu0 %v463, 93
    %v466 = vpop.permute.xlu0 %465
    %v468 = vadd.f32 %v458, %v466
    %469 = vset.pattern.permute.xlu0 6
    %470 = vperm.xlu0 %469, %v412
    %v471 = vpop.permute.xlu0 %470
    %v473 = vmul.f32 %v471, %v294
    %475 = vrot.lane.b32.xlu0 %v473, 86
    %v476 = vpop.permute.xlu0 %475
    %v478 = vadd.f32 %v468, %v476
    %v479 = vsub.f32 %v478, %v393
    %v480 = vmul.f32 %v479, 1.442695
    %v481 = vpow.pop %v480
    %vm482 = vcmask 56320
    %v483 = vsel %vm482, %v479, inf
    %484 = vmin.xlane.f32.xlu0 %v483
    %v485 = vpop.xlane.xlu0 %484
    %v486 = vsel %vm482, %v403, inf
    %487 = vmin.xlane.f32.xlu0 %v486
    %v488 = vpop.xlane.xlu0 %487
    %vm489 = vcmp.le.f32.partialorder %v479, %v485
    %vm490 = vcmp.le.f32.partialorder %v403, %v488
    %vm491 = vmand %vm489, %vm490
    %v492 = vsel %vm491, 1, 0
    %v493 = vcvt.s32.f32 %v492
    %v494 = vsub.f32 1.0, %v493
    %v495 = vsel %vm482, %v481, -inf
    %496 = vmax.xlane.f32.xlu0 %v495
    %v497 = vpop.xlane.xlu0 %496
    %v498 = vsub.f32 %v481, %v497
    %v499 = vmul.f32 %v498, 1.442695
    %v500 = vpow.pop %v499
    %v501 = vsel %vm482, %v500, 0.0
    %502 = vadd.xlane.f32.xlu0 %v501
    %v503 = vpop.xlane.xlu0 %502
    %v504 = vrcp.pop %v503
    %v505 = vmul.f32 %v503, %v504
    %v506 = vsub.f32 1.0, %v505
    %v507 = vmul.f32 %v504, %v506
    %v508 = vadd.f32 %v504, %v507
    %vm509 = vweird.f32 %v503
    %vm510 = vweird.f32 %v504
    %vm511 = vmor %vm509, %vm510
    %v512 = vsel %vm511, %v504, %v508
    %v513 = vand.u32 2147483647, %v503
    %vm514 = vcmp.eq.f32.partialorder %v513, 8.507059e+37
    %v515 = vand.u32 %v503, 2147483648
    %v516 = vor.u32 1.1754944e-38, %v515
    %v517 = vsel %vm514, %v516, %v512
    %v518 = vmul.f32 %v500, %v517
    %v519 = vmul.f32 %v518, %v494
    %521 = vset.pattern.permute.xlu0 0
    %522 = vperm.xlu0 %521, %v519
    %v523 = vpop.permute.xlu0 %522
    %v525 = vmul.f32 %v523, %v265
    %526 = vset.pattern.permute.xlu0 1
    %527 = vperm.xlu0 %526, %v519
    %v528 = vpop.permute.xlu0 %527
    %v530 = vmul.f32 %v528, %v265
    %532 = vrot.lane.b32.xlu0 %v530, 96
    %v533 = vpop.permute.xlu0 %532
    %v535 = vadd.f32 %v525, %v533
    %536 = vset.pattern.permute.xlu0 2
    %537 = vperm.xlu0 %536, %v519
    %v538 = vpop.permute.xlu0 %537
    %v540 = vmul.f32 %v538, %v265
    %542 = vrot.lane.b32.xlu0 %v540, 64
    %v543 = vpop.permute.xlu0 %542
    %v545 = vadd.f32 %v535, %v543
    %546 = vset.pattern.permute.xlu0 3
    %547 = vperm.xlu0 %546, %v519
    %v548 = vpop.permute.xlu0 %547
    %v550 = vmul.f32 %v548, %v265
    %552 = vrot.lane.b32.xlu0 %v550, 32
    %v553 = vpop.permute.xlu0 %552
    %v555 = vadd.f32 %v545, %v553
    %556 = vset.pattern.permute.xlu0 4
    %557 = vperm.xlu0 %556, %v519
    %v558 = vpop.permute.xlu0 %557
    %v560 = vmul.f32 %v558, %v266
    %v561 = vadd.f32 %v555, %v560
    %562 = vset.pattern.permute.xlu0 5
    %563 = vperm.xlu0 %562, %v519
    %v564 = vpop.permute.xlu0 %563
    %v566 = vmul.f32 %v564, %v266
    %568 = vrot.lane.b32.xlu0 %v566, 96
    %v569 = vpop.permute.xlu0 %568
    %v571 = vadd.f32 %v561, %v569
    %572 = vset.pattern.permute.xlu0 6
    %573 = vperm.xlu0 %572, %v519
    %v574 = vpop.permute.xlu0 %573
    %v576 = vmul.f32 %v574, %v266
    %578 = vrot.lane.b32.xlu0 %v576, 64
    %v579 = vpop.permute.xlu0 %578
    %v581 = vadd.f32 %v571, %v579
    %582 = vst.msk [vmem:[%s7] sm:$0xff] %vm73, %v581
    // Predicated region
    $region38: #{mmoe_forward.1} parent=1 // pred_check
      _
    $region39: #{mmoe_forward.1} parent=1 // pred_check_branch
      %584 = sbr.rel (0) target = $region41
    $region40: #{mmoe_forward.1} parent=1 // pred_region
      _
    $region41: #{mmoe_forward.1} parent=1 // pred_fallthru
      _
    // Predicated region
    $region42: #{mmoe_forward.1} parent=1 // pred_check
      _
    $region43: #{mmoe_forward.1} parent=1 // pred_check_branch
      %586 = sbr.rel (0) target = $region45
    $region44: #{mmoe_forward.1} parent=1 // pred_region
      _
    $region45: #{mmoe_forward.1} parent=1 // pred_fallthru
      _
    %587 = vsyncpa [#allocation3], 1
    %588 = vsyncpa [#allocation5], 1

</llo_original>
